<compile_context>
chip_gen: v5e
topology: v5e:2x2
jax: 0.10.0
libtpu: 0.0.40
codegen_flags: <defaults>
</compile_context>

<pallas_src>
import jax
import jax.numpy as jnp
import numpy as np
from jax.experimental import pallas as pl
from jax.experimental.pallas import tpu as pltpu

# ---------------- configuration (small, consistent with the module) ----------------
BATCH = 2
NUM_SEGMENTS = 4              # num_segments
NUM_CLASS = 16                # num_class (int branch of Classification_Network)
C_PAD = 128                   # lane-dense padded class dim (zero-padded columns)
MODALITIES = ("RGB", "Spec")  # len > 1  ->  feature concat (midfusion='concat')
FEAT_PER_MOD = 1024           # hard-coded 1024 per modality in the module
D_IN = FEAT_PER_MOD * len(MODALITIES)   # fc_action input dim = 1024 * num_modalities
N_ROWS = BATCH * NUM_SEGMENTS


# ---------------------------------- Pallas kernel ----------------------------------
def _cls_head_kernel(rgb_ref, spec_ref, w_rgb_ref, w_spec_ref, b_ref,
                     pre_ref, logits_ref):
    """fc_action over (virtually) concatenated modalities + avg consensus.

    rgb_ref    : (N, 1024)  f32   RGB modality features        (N = B*S)
    spec_ref   : (N, 1024)  f32   Spec modality features
    w_rgb_ref  : (1024, C_PAD) bf16  fc_action weight rows 0:1024   (pre-T, pre-padded)
    w_spec_ref : (1024, C_PAD) bf16  fc_action weight rows 1024:2048
    b_ref      : (1, C_PAD) f32   fc_action bias (zero-padded)
    pre_ref    -> (N, C_PAD) f32  base_out (lane-dense; sliced to C outside)
    logits_ref -> (B, C_PAD) f32  consensus('avg') output (lane-dense)
    """
    n = pre_ref.shape[0]
    bsz = logits_ref.shape[0]
    seg = n // bsz

    # Cast activations to bf16 (VPU, trivial) so the dot is a single native bf16
    # MXU pass; accumulate in f32.  Two partial dots into one f32 accumulator is
    # exactly concat(rgb, spec) @ W.
    rgb = rgb_ref[...].astype(w_rgb_ref.dtype)
    spec = spec_ref[...].astype(w_spec_ref.dtype)
    base = jnp.dot(rgb, w_rgb_ref[...], preferred_element_type=jnp.float32)
    base = base + jnp.dot(spec, w_spec_ref[...], preferred_element_type=jnp.float32)
    base = base + b_ref[...]
    pre_ref[...] = base.astype(pre_ref.dtype)

    # avg consensus over segments: unrolled contiguous row-slice means (rows are
    # batch-major: row index = b*S + s, matching torch .view(B, S, C)); avoids the
    # in-kernel (B,S,C) reshape/relayout.
    for bi in range(bsz):
        logits_ref[bi:bi + 1, :] = jnp.mean(
            base[bi * seg:(bi + 1) * seg, :], axis=0, keepdims=True
        ).astype(logits_ref.dtype)


def classification_head(rgb_feat, spec_feat, w_rgb_t, w_spec_t, bias_2d,
                        batch, num_segments, num_class):
    """Per-modality features (B*S,1024) each -> (logits (B,C), logits_pre (B,S,C))."""
    n, d_mod = rgb_feat.shape
    assert spec_feat.shape == (n, d_mod)
    assert n == batch * num_segments
    c_pad = w_rgb_t.shape[1]
    assert w_rgb_t.shape == (d_mod, c_pad) and w_spec_t.shape == (d_mod, c_pad)
    assert bias_2d.shape == (1, c_pad)

    full = lambda i: (0, 0)
    flops = 2 * n * (2 * d_mod) * c_pad
    bytes_accessed = (2 * n * d_mod * 4            # f32 activations
                      + 2 * d_mod * c_pad * 2      # bf16 weight slabs
                      + c_pad * 4                  # bias
                      + n * c_pad * 4              # pre out
                      + batch * c_pad * 4)         # logits out

    pre_pad, logits_pad = pl.pallas_call(
        _cls_head_kernel,
        out_shape=(
            jax.ShapeDtypeStruct((n, c_pad), jnp.float32),
            jax.ShapeDtypeStruct((batch, c_pad), jnp.float32),
        ),
        grid=(1,),
        in_specs=[
            pl.BlockSpec((n, d_mod), full),
            pl.BlockSpec((n, d_mod), full),
            pl.BlockSpec((d_mod, c_pad), full),
            pl.BlockSpec((d_mod, c_pad), full),
            pl.BlockSpec((1, c_pad), full),
        ],
        out_specs=[
            pl.BlockSpec((n, c_pad), full),
            pl.BlockSpec((batch, c_pad), full),
        ],
        compiler_params=pltpu.CompilerParams(dimension_semantics=("arbitrary",)),
        cost_estimate=pl.CostEstimate(flops=flops, transcendentals=0,
                                      bytes_accessed=bytes_accessed),
    )(rgb_feat, spec_feat, w_rgb_t, w_spec_t, bias_2d)

    # Slice padded classes away (pad columns are exactly zero: zero weight/bias pad).
    logits = logits_pad[:, :num_class]                               # (B, C)
    logits_pre = pre_pad[:, :num_class].reshape(batch, num_segments, num_class)
    return logits, logits_pre


def baseline_forward(modal_features, params, batch, num_segments):
    """modal_features: list of per-modality (B*S, 1024) feature tensors
    (output of the TBN backbone, which is not re-implemented here)."""
    rgb_feat, spec_feat = modal_features

    logits, logits_pre = classification_head(
        rgb_feat, spec_feat,
        params["wa_t_rgb"], params["wa_t_spec"], params["fc_action_b_2d"],
        batch, num_segments, NUM_CLASS)

    # Fusion_Network, midfusion='concat', len(modality) > 1: concat along feature dim
    # (needed only for the returned 'features' entry; done by XLA off the kernel path).
    features = jnp.concatenate(modal_features, axis=1)       # (B*S, 2048)

    out = {"logits": logits, "logits_pre": logits_pre}
    out.update({"features": features})                       # out.update(x) in torch
    return out


def init_params(key, d_in, num_class, c_pad):
    """Deterministic init matching torch: normal_(w, 0, 0.001), constant_(b, 0).
    The (D, C) transpose, per-modality split, zero-pad C->C_PAD and bf16 cast are
    all done ONCE here, off the forward path."""
    k1, _ = jax.random.split(key)
    std = 0.001
    fc_action_w = std * jax.random.normal(k1, (num_class, d_in), jnp.float32)  # torch (C, D)
    fc_action_b = jnp.zeros((num_class,), jnp.float32)

    wa_t = jnp.transpose(fc_action_w)                                   # (D, C)
    wa_t_pad = jnp.zeros((d_in, c_pad), jnp.float32).at[:, :num_class].set(wa_t)
    wa_t_pad = wa_t_pad.astype(jnp.bfloat16)                            # bf16, lane-dense
    bias_pad = jnp.zeros((1, c_pad), jnp.float32).at[0, :num_class].set(fc_action_b)

    return {
        "fc_action_w": fc_action_w,                            # kept for reference check
        "fc_action_b": fc_action_b,
        "wa_t_rgb": wa_t_pad[:FEAT_PER_MOD],                   # (1024, 128) bf16
        "wa_t_spec": wa_t_pad[FEAT_PER_MOD:],                  # (1024, 128) bf16
        "fc_action_b_2d": bias_pad,                            # (1, 128) f32
        # RGB_fc_action / acc / flow / gyro heads exist as torch parameters but their
        # outputs never reach the returned dict, so they are not materialized here.
    }


if __name__ == "__main__":
    key = jax.random.PRNGKey(0)
    k_rgb, k_spec, k_params = jax.random.split(key, 3)

    # Per-modality features the TBN backbone would emit: (B*S, 1024) each.
    rgb_feat = jax.random.normal(k_rgb, (N_ROWS, FEAT_PER_MOD), jnp.float32)
    spec_feat = jax.random.normal(k_spec, (N_ROWS, FEAT_PER_MOD), jnp.float32)

    params = init_params(k_params, D_IN, NUM_CLASS, C_PAD)

    out = baseline_forward([rgb_feat, spec_feat], params, BATCH, NUM_SEGMENTS)
    jax.block_until_ready(out["logits"])
    jax.block_until_ready(out["logits_pre"])
    jax.block_until_ready(out["features"])

    # Reference check against plain-JAX f32 math (same as the torch forward).
    # Tolerance relaxed for the bf16 weight/activation cast (f32 accumulation).
    feats = jnp.concatenate([rgb_feat, spec_feat], axis=1)
    base_ref = feats @ params["fc_action_w"].T + params["fc_action_b"]
    pre_ref = base_ref.reshape(BATCH, NUM_SEGMENTS, NUM_CLASS)
    logits_ref = pre_ref.mean(axis=1)

    assert out["logits"].shape == (BATCH, NUM_CLASS)
    assert out["logits_pre"].shape == (BATCH, NUM_SEGMENTS, NUM_CLASS)
    assert out["features"].shape == (N_ROWS, D_IN)
    np.testing.assert_allclose(np.asarray(out["logits"]), np.asarray(logits_ref),
                               rtol=2e-2, atol=2e-3)
    np.testing.assert_allclose(np.asarray(out["logits_pre"]), np.asarray(pre_ref),
                               rtol=2e-2, atol=2e-3)
    np.testing.assert_allclose(np.asarray(out["features"]), np.asarray(feats),
                               rtol=0, atol=0)

    print("KERNEL_OK")
</pallas_src>

<mosaic_0001>
module attributes {stable_mosaic.version = 11 : i64} {
  func.func @_cls_head_kernel(%arg0: i32, %arg1: memref<8x1024xf32, #tpu.memory_space<vmem>>, %arg2: memref<8x1024xf32, #tpu.memory_space<vmem>>, %arg3: memref<1024x128xbf16, #tpu.memory_space<vmem>>, %arg4: memref<1024x128xbf16, #tpu.memory_space<vmem>>, %arg5: memref<1x128xf32, #tpu.memory_space<vmem>>, %arg6: memref<8x128xf32, #tpu.memory_space<vmem>>, %arg7: memref<2x128xf32, #tpu.memory_space<vmem>>) attributes {dimension_semantics = [#tpu.dimension_semantics<arbitrary>], iteration_bounds = array<i64: 1>, scalar_prefetch = 0 : i64, scratch_operands = 0 : i64, tpu.core_type = #tpu.core_type<tc>, window_params = [{pipeline_mode = #tpu.pipeline_mode<synchronous>, transform_indices = @transform_0, window_bounds = array<i64: 8, 1024>}, {pipeline_mode = #tpu.pipeline_mode<synchronous>, transform_indices = @transform_1, window_bounds = array<i64: 8, 1024>}, {pipeline_mode = #tpu.pipeline_mode<synchronous>, transform_indices = @transform_2, window_bounds = array<i64: 1024, 128>}, {pipeline_mode = #tpu.pipeline_mode<synchronous>, transform_indices = @transform_3, window_bounds = array<i64: 1024, 128>}, {pipeline_mode = #tpu.pipeline_mode<synchronous>, transform_indices = @transform_4, window_bounds = array<i64: 1, 128>}, {pipeline_mode = #tpu.pipeline_mode<synchronous>, transform_indices = @transform_5, window_bounds = array<i64: 8, 128>}, {pipeline_mode = #tpu.pipeline_mode<synchronous>, transform_indices = @transform_6, window_bounds = array<i64: 2, 128>}]} {
    %c0 = arith.constant 0 : index
    %c0_0 = arith.constant 0 : index
    %0 = vector.load %arg1[%c0, %c0_0] : memref<8x1024xf32, #tpu.memory_space<vmem>>, vector<8x1024xf32>
    %1 = arith.truncf %0 : vector<8x1024xf32> to vector<8x1024xbf16>
    %c0_1 = arith.constant 0 : index
    %c0_2 = arith.constant 0 : index
    %2 = vector.load %arg2[%c0_1, %c0_2] : memref<8x1024xf32, #tpu.memory_space<vmem>>, vector<8x1024xf32>
    %3 = arith.truncf %2 : vector<8x1024xf32> to vector<8x1024xbf16>
    %c0_3 = arith.constant 0 : index
    %c0_4 = arith.constant 0 : index
    %4 = vector.load %arg3[%c0_3, %c0_4] : memref<1024x128xbf16, #tpu.memory_space<vmem>>, vector<1024x128xbf16>
    %cst = arith.constant dense<0.000000e+00> : vector<8x128xf32>
    %5 = tpu.matmul %1, %4, %cst {dimension_numbers = #tpu.dot_dimension_numbers<[1], [0], [0], [1], [0, 0, 1, 1], [], []>} : vector<8x1024xbf16>, vector<1024x128xbf16>, vector<8x128xf32> -> vector<8x128xf32>
    %c0_5 = arith.constant 0 : index
    %c0_6 = arith.constant 0 : index
    %6 = vector.load %arg4[%c0_5, %c0_6] : memref<1024x128xbf16, #tpu.memory_space<vmem>>, vector<1024x128xbf16>
    %cst_7 = arith.constant dense<0.000000e+00> : vector<8x128xf32>
    %7 = tpu.matmul %3, %6, %cst_7 {dimension_numbers = #tpu.dot_dimension_numbers<[1], [0], [0], [1], [0, 0, 1, 1], [], []>} : vector<8x1024xbf16>, vector<1024x128xbf16>, vector<8x128xf32> -> vector<8x128xf32>
    %8 = arith.addf %5, %7 : vector<8x128xf32>
    %c0_8 = arith.constant 0 : index
    %c0_9 = arith.constant 0 : index
    %9 = vector.load %arg5[%c0_8, %c0_9] : memref<1x128xf32, #tpu.memory_space<vmem>>, vector<1x128xf32>
    %10 = vector.broadcast %9 : vector<1x128xf32> to vector<8x128xf32>
    %11 = arith.addf %8, %10 : vector<8x128xf32>
    %c0_10 = arith.constant 0 : index
    %c0_11 = arith.constant 0 : index
    %12 = vector.load %arg6[%c0_10, %c0_11] : memref<8x128xf32, #tpu.memory_space<vmem>>, vector<8x128xf32>
    tpu.vector_store %arg6[%c0_10, %c0_11], %11 {strides = array<i32>} : memref<8x128xf32, #tpu.memory_space<vmem>>, vector<8x128xf32>,
    %13 = vector.extract_strided_slice %11 {offsets = [0, 0], sizes = [4, 128], strides = [1, 1]} : vector<8x128xf32> to vector<4x128xf32>
    %cst_12 = arith.constant dense<0.000000e+00> : vector<128xf32>
    %14 = vector.multi_reduction <add>, %13, %cst_12 [0] : vector<4x128xf32> to vector<128xf32>
    %15 = vector.shape_cast %14 : vector<128xf32> to vector<1x128xf32>
    %cst_13 = arith.constant 4.000000e+00 : f32
    %16 = vector.broadcast %cst_13 : f32 to vector<1x128xf32>
    %17 = arith.divf %15, %16 : vector<1x128xf32>
    %c0_14 = arith.constant 0 : index
    %c0_15 = arith.constant 0 : index
    %18 = vector.load %arg7[%c0_14, %c0_15] : memref<2x128xf32, #tpu.memory_space<vmem>>, vector<1x128xf32>
    tpu.vector_store %arg7[%c0_14, %c0_15], %17 {strides = array<i32>} : memref<2x128xf32, #tpu.memory_space<vmem>>, vector<1x128xf32>,
    %19 = vector.extract_strided_slice %11 {offsets = [4, 0], sizes = [4, 128], strides = [1, 1]} : vector<8x128xf32> to vector<4x128xf32>
    %cst_16 = arith.constant dense<0.000000e+00> : vector<128xf32>
    %20 = vector.multi_reduction <add>, %19, %cst_16 [0] : vector<4x128xf32> to vector<128xf32>
    %21 = vector.shape_cast %20 : vector<128xf32> to vector<1x128xf32>
    %cst_17 = arith.constant 4.000000e+00 : f32
    %22 = vector.broadcast %cst_17 : f32 to vector<1x128xf32>
    %23 = arith.divf %21, %22 : vector<1x128xf32>
    %c1 = arith.constant 1 : index
    %c0_18 = arith.constant 0 : index
    %24 = vector.load %arg7[%c1, %c0_18] : memref<2x128xf32, #tpu.memory_space<vmem>>, vector<1x128xf32>
    tpu.vector_store %arg7[%c1, %c0_18], %23 {strides = array<i32>} : memref<2x128xf32, #tpu.memory_space<vmem>>, vector<1x128xf32>,
    return
  }
  func.func @transform_0(%arg0: i32) -> (i32, i32) {
    %c0_i32 = arith.constant 0 : i32
    %c0_i32_0 = arith.constant 0 : i32
    %c0_i32_1 = arith.constant 0 : i32
    return %c0_i32, %c0_i32_0 : i32, i32
  }
  func.func @transform_1(%arg0: i32) -> (i32, i32) {
    %c0_i32 = arith.constant 0 : i32
    %c0_i32_0 = arith.constant 0 : i32
    %c0_i32_1 = arith.constant 0 : i32
    return %c0_i32, %c0_i32_0 : i32, i32
  }
  func.func @transform_2(%arg0: i32) -> (i32, i32) {
    %c0_i32 = arith.constant 0 : i32
    %c0_i32_0 = arith.constant 0 : i32
    %c0_i32_1 = arith.constant 0 : i32
    return %c0_i32, %c0_i32_0 : i32, i32
  }
  func.func @transform_3(%arg0: i32) -> (i32, i32) {
    %c0_i32 = arith.constant 0 : i32
    %c0_i32_0 = arith.constant 0 : i32
    %c0_i32_1 = arith.constant 0 : i32
    return %c0_i32, %c0_i32_0 : i32, i32
  }
  func.func @transform_4(%arg0: i32) -> (i32, i32) {
    %c0_i32 = arith.constant 0 : i32
    %c0_i32_0 = arith.constant 0 : i32
    %c0_i32_1 = arith.constant 0 : i32
    return %c0_i32, %c0_i32_0 : i32, i32
  }
  func.func @transform_5(%arg0: i32) -> (i32, i32) {
    %c0_i32 = arith.constant 0 : i32
    %c0_i32_0 = arith.constant 0 : i32
    %c0_i32_1 = arith.constant 0 : i32
    return %c0_i32, %c0_i32_0 : i32, i32
  }
  func.func @transform_6(%arg0: i32) -> (i32, i32) {
    %c0_i32 = arith.constant 0 : i32
    %c0_i32_0 = arith.constant 0 : i32
    %c0_i32_1 = arith.constant 0 : i32
    return %c0_i32, %c0_i32_0 : i32, i32
  }
}

</mosaic_0001>

<llo_original>
// kernel: tpu_custom_call.1
$region0: #{tpu_custom_call.1}
  #allocation0 [shape = 'u32[]', space=smem, size = 0x4, offset = 0x4, fixed_abs, tag = 'smem constant byte address 0x4 - core index']
  #allocation1 [shape = 'u32[72,128]{1,0:T(1,128)}', space=vmem, size = 0x9000, scoped, tag = 'internal scratch']
  %s0 = inlined_call_operand.hbm [shape: f32[8,1024], index: 0, kind: input, shape index: {}]
  %s1 = inlined_call_operand.hbm [shape: f32[8,1024], index: 1, kind: input, shape index: {}]
  %s2 = inlined_call_operand.hbm [shape: bf16[1024,128], index: 2, kind: input, shape index: {}]
  %s3 = inlined_call_operand.hbm [shape: bf16[1024,128], index: 3, kind: input, shape index: {}]
  %s4 = inlined_call_operand.vmem [shape: f32[1,128], index: 4, kind: input, shape index: {}]
  %s5 = inlined_call_operand.hbm [shape: f32[8,128], index: 5, kind: output, shape index: {0}]
  %s6 = inlined_call_operand.hbm [shape: f32[2,128], index: 6, kind: output, shape index: {1}]
  %7 = xla_tuple %s5, %s6
  %s8 = sld [smem:[#allocation0]]
  $region54: #{tpu_custom_call.1} parent=0
    _
  %s10 = ssub.s32 1, %s8
  %s11 = scalar_select 0, %s10, %s8
  $region1: #{tpu_custom_call.1} parent=0
    #allocation2 [shape = 'u8[32768]{0}', space=vmem, size = 0x8000, scoped, tag = 'input window, operand 0, single buffered']
    #allocation3 [shape = 's32[1]{0}', space=sflag, size = 0x4, scoped, tag = 'scoped memory for tpu_custom_call.1']
    #allocation4 [shape = 's32[1]{0}', space=sflag, size = 0x4, scoped, tag = 'scoped memory for tpu_custom_call.1']
    #allocation5 [shape = 'u8[32768]{0}', space=vmem, size = 0x8000, scoped, tag = 'input window, operand 1, single buffered']
    #allocation6 [shape = 's32[1]{0}', space=sflag, size = 0x4, scoped, tag = 'scoped memory for tpu_custom_call.1']
    #allocation7 [shape = 'u8[262144]{0}', space=vmem, size = 0x40000, scoped, tag = 'input window, operand 2, single buffered']
    #allocation8 [shape = 'u8[262144]{0}', space=vmem, size = 0x40000, scoped, tag = 'input window, operand 3, single buffered']
    #allocation9 [shape = 's32[1]{0}', space=sflag, size = 0x4, scoped, tag = 'scoped memory for tpu_custom_call.1']
    #allocation10 [shape = 'u8[4096]{0}', space=vmem, size = 0x1000, scoped, tag = 'output window, operand 0, single buffered']
    #allocation11 [shape = 'u8[1024]{0}', space=vmem, size = 0x400, scoped, tag = 'output window, operand 1, single buffered']
    #allocation12 [shape = 's32[1]{0}', space=sflag, size = 0x4, scoped, tag = 'scoped memory for tpu_custom_call.1']
    %12 = vsyncpa [#allocation3], 0
    %13 = vsyncpa [#allocation6], 0
    %14 = vsyncpa [#allocation9], 0
    %15 = vsyncpa [#allocation4], 0
    %16 = vsyncpa [#allocation12], 0
    // Predicated region
    $region2: #{tpu_custom_call.1} parent=1 // pred_check
      _
    $region3: #{tpu_custom_call.1} parent=1 // pred_check_branch
      %18 = sbr.rel (0) target = $region5
    $region4: #{tpu_custom_call.1} parent=1 // pred_region
      %20 = vsyncadd [#allocation3], 0
      %s22 = sshll.u32 %s0, 4
      %s23 = int_to_ptr.hbm [resolvable:$true] %s22
      %s24 = sshll.u32 [#allocation2], 4
      %s25 = int_to_ptr.vmem [resolvable:$true] %s24
      %27 = dma.hbm_to_vmem [thread:$0]  %s23, 1024, %s25, [#allocation3]
    $region5: #{tpu_custom_call.1} parent=1 // pred_fallthru
      _
    // Predicated region
    $region6: #{tpu_custom_call.1} parent=1 // pred_check
      _
    $region7: #{tpu_custom_call.1} parent=1 // pred_check_branch
      %29 = sbr.rel (0) target = $region9
    $region8: #{tpu_custom_call.1} parent=1 // pred_region
      %31 = vsyncadd [#allocation6], 0
      %s33 = sshll.u32 %s1, 4
      %s34 = int_to_ptr.hbm [resolvable:$true] %s33
      %s35 = sshll.u32 [#allocation5], 4
      %s36 = int_to_ptr.vmem [resolvable:$true] %s35
      %38 = dma.hbm_to_vmem [thread:$0]  %s34, 1024, %s36, [#allocation6]
    $region9: #{tpu_custom_call.1} parent=1 // pred_fallthru
      _
    // Predicated region
    $region10: #{tpu_custom_call.1} parent=1 // pred_check
      _
    $region11: #{tpu_custom_call.1} parent=1 // pred_check_branch
      %40 = sbr.rel (0) target = $region13
    $region12: #{tpu_custom_call.1} parent=1 // pred_region
      %42 = vsyncadd [#allocation6], 0
      %s43 = sshll.u32 %s2, 4
      %s44 = int_to_ptr.hbm [resolvable:$true] %s43
      %s45 = sshll.u32 [#allocation7], 4
      %s46 = int_to_ptr.vmem [resolvable:$true] %s45
      %51 = dma.hbm_to_vmem [thread:$0]  %s44, 8192, %s46, [#allocation6], 64, 64, 4
    $region13: #{tpu_custom_call.1} parent=1 // pred_fallthru
      _
    // Predicated region
    $region14: #{tpu_custom_call.1} parent=1 // pred_check
      _
    $region15: #{tpu_custom_call.1} parent=1 // pred_check_branch
      %53 = sbr.rel (0) target = $region17
    $region16: #{tpu_custom_call.1} parent=1 // pred_region
      %55 = vsyncadd [#allocation9], 0
      %s56 = sshll.u32 %s3, 4
      %s57 = int_to_ptr.hbm [resolvable:$true] %s56
      %s58 = sshll.u32 [#allocation8], 4
      %s59 = int_to_ptr.vmem [resolvable:$true] %s58
      %64 = dma.hbm_to_vmem [thread:$0]  %s57, 8192, %s59, [#allocation9], 64, 64, 4
    $region17: #{tpu_custom_call.1} parent=1 // pred_fallthru
      _
    // Predicated region
    $region18: #{tpu_custom_call.1} parent=1 // pred_check
      _
    $region19: #{tpu_custom_call.1} parent=1 // pred_check_branch
      %66 = sbr.rel (0) target = $region21
    $region20: #{tpu_custom_call.1} parent=1 // pred_region
      _
    $region21: #{tpu_custom_call.1} parent=1 // pred_fallthru
      _
    // Predicated region
    $region22: #{tpu_custom_call.1} parent=1 // pred_check
      _
    $region23: #{tpu_custom_call.1} parent=1 // pred_check_branch
      %68 = sbr.rel (0) target = $region25
    $region24: #{tpu_custom_call.1} parent=1 // pred_region
      %70 = dma.done [#allocation3], 1024
    $region25: #{tpu_custom_call.1} parent=1 // pred_fallthru
      _
    // Predicated region
    $region26: #{tpu_custom_call.1} parent=1 // pred_check
      _
    $region27: #{tpu_custom_call.1} parent=1 // pred_check_branch
      %72 = sbr.rel (0) target = $region29
    $region28: #{tpu_custom_call.1} parent=1 // pred_region
      %74 = dma.done [#allocation6], 1024
    $region29: #{tpu_custom_call.1} parent=1 // pred_fallthru
      _
    // Predicated region
    $region30: #{tpu_custom_call.1} parent=1 // pred_check
      _
    $region31: #{tpu_custom_call.1} parent=1 // pred_check_branch
      %76 = sbr.rel (0) target = $region33
    $region32: #{tpu_custom_call.1} parent=1 // pred_region
      %78 = dma.done [#allocation6], 8192
    $region33: #{tpu_custom_call.1} parent=1 // pred_fallthru
      _
    // Predicated region
    $region34: #{tpu_custom_call.1} parent=1 // pred_check
      _
    $region35: #{tpu_custom_call.1} parent=1 // pred_check_branch
      %80 = sbr.rel (0) target = $region37
    $region36: #{tpu_custom_call.1} parent=1 // pred_region
      %82 = dma.done [#allocation9], 8192
    $region37: #{tpu_custom_call.1} parent=1 // pred_fallthru
      _
    %v83 = vld [vmem:[#allocation2] sm:$0xff]
    %v84 = vld [vmem:[#allocation2 + $0x8] sm:$0xff]
    %v85 = vld [vmem:[#allocation2 + $0x10] sm:$0xff]
    %v86 = vld [vmem:[#allocation2 + $0x18] sm:$0xff]
    %v87 = vld [vmem:[#allocation2 + $0x20] sm:$0xff]
    %v88 = vld [vmem:[#allocation2 + $0x28] sm:$0xff]
    %v89 = vld [vmem:[#allocation2 + $0x30] sm:$0xff]
    %v90 = vld [vmem:[#allocation2 + $0x38] sm:$0xff]
    %v91 = vpack.c.bf16 %v83, %v83
    %v92 = vpack.c.bf16 %v84, %v84
    %v93 = vpack.c.bf16 %v85, %v85
    %v94 = vpack.c.bf16 %v86, %v86
    %v95 = vpack.c.bf16 %v87, %v87
    %v96 = vpack.c.bf16 %v88, %v88
    %v97 = vpack.c.bf16 %v89, %v89
    %v98 = vpack.c.bf16 %v90, %v90
    %v99 = vld [vmem:[#allocation5] sm:$0xff]
    %v100 = vld [vmem:[#allocation5 + $0x8] sm:$0xff]
    %v101 = vld [vmem:[#allocation5 + $0x10] sm:$0xff]
    %v102 = vld [vmem:[#allocation5 + $0x18] sm:$0xff]
    %v103 = vld [vmem:[#allocation5 + $0x20] sm:$0xff]
    %v104 = vld [vmem:[#allocation5 + $0x28] sm:$0xff]
    %v105 = vld [vmem:[#allocation5 + $0x30] sm:$0xff]
    %v106 = vld [vmem:[#allocation5 + $0x38] sm:$0xff]
    %v107 = vpack.c.bf16 %v99, %v99
    %v108 = vpack.c.bf16 %v100, %v100
    %v109 = vpack.c.bf16 %v101, %v101
    %v110 = vpack.c.bf16 %v102, %v102
    %v111 = vpack.c.bf16 %v103, %v103
    %v112 = vpack.c.bf16 %v104, %v104
    %v113 = vpack.c.bf16 %v105, %v105
    %v114 = vpack.c.bf16 %v106, %v106
    %v115 = vld [vmem:[#allocation7] sm:$0xf]
    %v116 = vld [vmem:[#allocation7 + $0x4] sm:$0xf]
    %v117 = vld [vmem:[#allocation7 + $0x8] sm:$0xf]
    %v118 = vld [vmem:[#allocation7 + $0xc] sm:$0xf]
    %v119 = vld [vmem:[#allocation7 + $0x10] sm:$0xf]
    %v120 = vld [vmem:[#allocation7 + $0x14] sm:$0xf]
    %v121 = vld [vmem:[#allocation7 + $0x18] sm:$0xf]
    %v122 = vld [vmem:[#allocation7 + $0x1c] sm:$0xf]
    %v123 = vld [vmem:[#allocation7 + $0x20] sm:$0xf]
    %v124 = vld [vmem:[#allocation7 + $0x24] sm:$0xf]
    %v125 = vld [vmem:[#allocation7 + $0x28] sm:$0xf]
    %v126 = vld [vmem:[#allocation7 + $0x2c] sm:$0xf]
    %v127 = vld [vmem:[#allocation7 + $0x30] sm:$0xf]
    %v128 = vld [vmem:[#allocation7 + $0x34] sm:$0xf]
    %v129 = vld [vmem:[#allocation7 + $0x38] sm:$0xf]
    %v130 = vld [vmem:[#allocation7 + $0x3c] sm:$0xf]
    %v131 = vld [vmem:[#allocation7 + $0x40] sm:$0xf]
    %v132 = vld [vmem:[#allocation7 + $0x44] sm:$0xf]
    %v133 = vld [vmem:[#allocation7 + $0x48] sm:$0xf]
    %v134 = vld [vmem:[#allocation7 + $0x4c] sm:$0xf]
    %v135 = vld [vmem:[#allocation7 + $0x50] sm:$0xf]
    %v136 = vld [vmem:[#allocation7 + $0x54] sm:$0xf]
    %v137 = vld [vmem:[#allocation7 + $0x58] sm:$0xf]
    %v138 = vld [vmem:[#allocation7 + $0x5c] sm:$0xf]
    %v139 = vld [vmem:[#allocation7 + $0x60] sm:$0xf]
    %v140 = vld [vmem:[#allocation7 + $0x64] sm:$0xf]
    %v141 = vld [vmem:[#allocation7 + $0x68] sm:$0xf]
    %v142 = vld [vmem:[#allocation7 + $0x6c] sm:$0xf]
    %v143 = vld [vmem:[#allocation7 + $0x70] sm:$0xf]
    %v144 = vld [vmem:[#allocation7 + $0x74] sm:$0xf]
    %v145 = vld [vmem:[#allocation7 + $0x78] sm:$0xf]
    %v146 = vld [vmem:[#allocation7 + $0x7c] sm:$0xf]
    %v147 = vld [vmem:[#allocation7 + $0x80] sm:$0xf]
    %v148 = vld [vmem:[#allocation7 + $0x84] sm:$0xf]
    %v149 = vld [vmem:[#allocation7 + $0x88] sm:$0xf]
    %v150 = vld [vmem:[#allocation7 + $0x8c] sm:$0xf]
    %v151 = vld [vmem:[#allocation7 + $0x90] sm:$0xf]
    %v152 = vld [vmem:[#allocation7 + $0x94] sm:$0xf]
    %v153 = vld [vmem:[#allocation7 + $0x98] sm:$0xf]
    %v154 = vld [vmem:[#allocation7 + $0x9c] sm:$0xf]
    %v155 = vld [vmem:[#allocation7 + $0xa0] sm:$0xf]
    %v156 = vld [vmem:[#allocation7 + $0xa4] sm:$0xf]
    %v157 = vld [vmem:[#allocation7 + $0xa8] sm:$0xf]
    %v158 = vld [vmem:[#allocation7 + $0xac] sm:$0xf]
    %v159 = vld [vmem:[#allocation7 + $0xb0] sm:$0xf]
    %v160 = vld [vmem:[#allocation7 + $0xb4] sm:$0xf]
    %v161 = vld [vmem:[#allocation7 + $0xb8] sm:$0xf]
    %v162 = vld [vmem:[#allocation7 + $0xbc] sm:$0xf]
    %v163 = vld [vmem:[#allocation7 + $0xc0] sm:$0xf]
    %v164 = vld [vmem:[#allocation7 + $0xc4] sm:$0xf]
    %v165 = vld [vmem:[#allocation7 + $0xc8] sm:$0xf]
    %v166 = vld [vmem:[#allocation7 + $0xcc] sm:$0xf]
    %v167 = vld [vmem:[#allocation7 + $0xd0] sm:$0xf]
    %v168 = vld [vmem:[#allocation7 + $0xd4] sm:$0xf]
    %v169 = vld [vmem:[#allocation7 + $0xd8] sm:$0xf]
    %v170 = vld [vmem:[#allocation7 + $0xdc] sm:$0xf]
    %v171 = vld [vmem:[#allocation7 + $0xe0] sm:$0xf]
    %v172 = vld [vmem:[#allocation7 + $0xe4] sm:$0xf]
    %v173 = vld [vmem:[#allocation7 + $0xe8] sm:$0xf]
    %v174 = vld [vmem:[#allocation7 + $0xec] sm:$0xf]
    %v175 = vld [vmem:[#allocation7 + $0xf0] sm:$0xf]
    %v176 = vld [vmem:[#allocation7 + $0xf4] sm:$0xf]
    %v177 = vld [vmem:[#allocation7 + $0xf8] sm:$0xf]
    %v178 = vld [vmem:[#allocation7 + $0xfc] sm:$0xf]
    %v179 = vld [vmem:[#allocation7 + $0x100] sm:$0xf]
    %v180 = vld [vmem:[#allocation7 + $0x104] sm:$0xf]
    %v181 = vld [vmem:[#allocation7 + $0x108] sm:$0xf]
    %v182 = vld [vmem:[#allocation7 + $0x10c] sm:$0xf]
    %v183 = vld [vmem:[#allocation7 + $0x110] sm:$0xf]
    %v184 = vld [vmem:[#allocation7 + $0x114] sm:$0xf]
    %v185 = vld [vmem:[#allocation7 + $0x118] sm:$0xf]
    %v186 = vld [vmem:[#allocation7 + $0x11c] sm:$0xf]
    %v187 = vld [vmem:[#allocation7 + $0x120] sm:$0xf]
    %v188 = vld [vmem:[#allocation7 + $0x124] sm:$0xf]
    %v189 = vld [vmem:[#allocation7 + $0x128] sm:$0xf]
    %v190 = vld [vmem:[#allocation7 + $0x12c] sm:$0xf]
    %v191 = vld [vmem:[#allocation7 + $0x130] sm:$0xf]
    %v192 = vld [vmem:[#allocation7 + $0x134] sm:$0xf]
    %v193 = vld [vmem:[#allocation7 + $0x138] sm:$0xf]
    %v194 = vld [vmem:[#allocation7 + $0x13c] sm:$0xf]
    %v195 = vld [vmem:[#allocation7 + $0x140] sm:$0xf]
    %v196 = vld [vmem:[#allocation7 + $0x144] sm:$0xf]
    %v197 = vld [vmem:[#allocation7 + $0x148] sm:$0xf]
    %v198 = vld [vmem:[#allocation7 + $0x14c] sm:$0xf]
    %v199 = vld [vmem:[#allocation7 + $0x150] sm:$0xf]
    %v200 = vld [vmem:[#allocation7 + $0x154] sm:$0xf]
    %v201 = vld [vmem:[#allocation7 + $0x158] sm:$0xf]
    %v202 = vld [vmem:[#allocation7 + $0x15c] sm:$0xf]
    %v203 = vld [vmem:[#allocation7 + $0x160] sm:$0xf]
    %v204 = vld [vmem:[#allocation7 + $0x164] sm:$0xf]
    %v205 = vld [vmem:[#allocation7 + $0x168] sm:$0xf]
    %v206 = vld [vmem:[#allocation7 + $0x16c] sm:$0xf]
    %v207 = vld [vmem:[#allocation7 + $0x170] sm:$0xf]
    %v208 = vld [vmem:[#allocation7 + $0x174] sm:$0xf]
    %v209 = vld [vmem:[#allocation7 + $0x178] sm:$0xf]
    %v210 = vld [vmem:[#allocation7 + $0x17c] sm:$0xf]
    %v211 = vld [vmem:[#allocation7 + $0x180] sm:$0xf]
    %v212 = vld [vmem:[#allocation7 + $0x184] sm:$0xf]
    %v213 = vld [vmem:[#allocation7 + $0x188] sm:$0xf]
    %v214 = vld [vmem:[#allocation7 + $0x18c] sm:$0xf]
    %v215 = vld [vmem:[#allocation7 + $0x190] sm:$0xf]
    %v216 = vld [vmem:[#allocation7 + $0x194] sm:$0xf]
    %v217 = vld [vmem:[#allocation7 + $0x198] sm:$0xf]
    %v218 = vld [vmem:[#allocation7 + $0x19c] sm:$0xf]
    %v219 = vld [vmem:[#allocation7 + $0x1a0] sm:$0xf]
    %v220 = vld [vmem:[#allocation7 + $0x1a4] sm:$0xf]
    %v221 = vld [vmem:[#allocation7 + $0x1a8] sm:$0xf]
    %v222 = vld [vmem:[#allocation7 + $0x1ac] sm:$0xf]
    %v223 = vld [vmem:[#allocation7 + $0x1b0] sm:$0xf]
    %v224 = vld [vmem:[#allocation7 + $0x1b4] sm:$0xf]
    %v225 = vld [vmem:[#allocation7 + $0x1b8] sm:$0xf]
    %v226 = vld [vmem:[#allocation7 + $0x1bc] sm:$0xf]
    %v227 = vld [vmem:[#allocation7 + $0x1c0] sm:$0xf]
    %v228 = vld [vmem:[#allocation7 + $0x1c4] sm:$0xf]
    %v229 = vld [vmem:[#allocation7 + $0x1c8] sm:$0xf]
    %v230 = vld [vmem:[#allocation7 + $0x1cc] sm:$0xf]
    %v231 = vld [vmem:[#allocation7 + $0x1d0] sm:$0xf]
    %v232 = vld [vmem:[#allocation7 + $0x1d4] sm:$0xf]
    %v233 = vld [vmem:[#allocation7 + $0x1d8] sm:$0xf]
    %v234 = vld [vmem:[#allocation7 + $0x1dc] sm:$0xf]
    %v235 = vld [vmem:[#allocation7 + $0x1e0] sm:$0xf]
    %v236 = vld [vmem:[#allocation7 + $0x1e4] sm:$0xf]
    %v237 = vld [vmem:[#allocation7 + $0x1e8] sm:$0xf]
    %v238 = vld [vmem:[#allocation7 + $0x1ec] sm:$0xf]
    %v239 = vld [vmem:[#allocation7 + $0x1f0] sm:$0xf]
    %v240 = vld [vmem:[#allocation7 + $0x1f4] sm:$0xf]
    %v241 = vld [vmem:[#allocation7 + $0x1f8] sm:$0xf]
    %v242 = vld [vmem:[#allocation7 + $0x1fc] sm:$0xf]
    %v243 = vld [vmem:[#allocation8] sm:$0xf]
    %v244 = vld [vmem:[#allocation8 + $0x4] sm:$0xf]
    %v245 = vld [vmem:[#allocation8 + $0x8] sm:$0xf]
    %v246 = vld [vmem:[#allocation8 + $0xc] sm:$0xf]
    %v247 = vld [vmem:[#allocation8 + $0x10] sm:$0xf]
    %v248 = vld [vmem:[#allocation8 + $0x14] sm:$0xf]
    %v249 = vld [vmem:[#allocation8 + $0x18] sm:$0xf]
    %v250 = vld [vmem:[#allocation8 + $0x1c] sm:$0xf]
    %v251 = vld [vmem:[#allocation8 + $0x20] sm:$0xf]
    %v252 = vld [vmem:[#allocation8 + $0x24] sm:$0xf]
    %v253 = vld [vmem:[#allocation8 + $0x28] sm:$0xf]
    %v254 = vld [vmem:[#allocation8 + $0x2c] sm:$0xf]
    %v255 = vld [vmem:[#allocation8 + $0x30] sm:$0xf]
    %v256 = vld [vmem:[#allocation8 + $0x34] sm:$0xf]
    %v257 = vld [vmem:[#allocation8 + $0x38] sm:$0xf]
    %v258 = vld [vmem:[#allocation8 + $0x3c] sm:$0xf]
    %v259 = vld [vmem:[#allocation8 + $0x40] sm:$0xf]
    %v260 = vld [vmem:[#allocation8 + $0x44] sm:$0xf]
    %v261 = vld [vmem:[#allocation8 + $0x48] sm:$0xf]
    %v262 = vld [vmem:[#allocation8 + $0x4c] sm:$0xf]
    %v263 = vld [vmem:[#allocation8 + $0x50] sm:$0xf]
    %v264 = vld [vmem:[#allocation8 + $0x54] sm:$0xf]
    %v265 = vld [vmem:[#allocation8 + $0x58] sm:$0xf]
    %v266 = vld [vmem:[#allocation8 + $0x5c] sm:$0xf]
    %v267 = vld [vmem:[#allocation8 + $0x60] sm:$0xf]
    %v268 = vld [vmem:[#allocation8 + $0x64] sm:$0xf]
    %v269 = vld [vmem:[#allocation8 + $0x68] sm:$0xf]
    %v270 = vld [vmem:[#allocation8 + $0x6c] sm:$0xf]
    %v271 = vld [vmem:[#allocation8 + $0x70] sm:$0xf]
    %v272 = vld [vmem:[#allocation8 + $0x74] sm:$0xf]
    %v273 = vld [vmem:[#allocation8 + $0x78] sm:$0xf]
    %v274 = vld [vmem:[#allocation8 + $0x7c] sm:$0xf]
    %v275 = vld [vmem:[#allocation8 + $0x80] sm:$0xf]
    %v276 = vld [vmem:[#allocation8 + $0x84] sm:$0xf]
    %v277 = vld [vmem:[#allocation8 + $0x88] sm:$0xf]
    %v278 = vld [vmem:[#allocation8 + $0x8c] sm:$0xf]
    %v279 = vld [vmem:[#allocation8 + $0x90] sm:$0xf]
    %v280 = vld [vmem:[#allocation8 + $0x94] sm:$0xf]
    %v281 = vld [vmem:[#allocation8 + $0x98] sm:$0xf]
    %v282 = vld [vmem:[#allocation8 + $0x9c] sm:$0xf]
    %v283 = vld [vmem:[#allocation8 + $0xa0] sm:$0xf]
    %v284 = vld [vmem:[#allocation8 + $0xa4] sm:$0xf]
    %v285 = vld [vmem:[#allocation8 + $0xa8] sm:$0xf]
    %v286 = vld [vmem:[#allocation8 + $0xac] sm:$0xf]
    %v287 = vld [vmem:[#allocation8 + $0xb0] sm:$0xf]
    %v288 = vld [vmem:[#allocation8 + $0xb4] sm:$0xf]
    %v289 = vld [vmem:[#allocation8 + $0xb8] sm:$0xf]
    %v290 = vld [vmem:[#allocation8 + $0xbc] sm:$0xf]
    %v291 = vld [vmem:[#allocation8 + $0xc0] sm:$0xf]
    %v292 = vld [vmem:[#allocation8 + $0xc4] sm:$0xf]
    %v293 = vld [vmem:[#allocation8 + $0xc8] sm:$0xf]
    %v294 = vld [vmem:[#allocation8 + $0xcc] sm:$0xf]
    %v295 = vld [vmem:[#allocation8 + $0xd0] sm:$0xf]
    %v296 = vld [vmem:[#allocation8 + $0xd4] sm:$0xf]
    %v297 = vld [vmem:[#allocation8 + $0xd8] sm:$0xf]
    %v298 = vld [vmem:[#allocation8 + $0xdc] sm:$0xf]
    %v299 = vld [vmem:[#allocation8 + $0xe0] sm:$0xf]
    %v300 = vld [vmem:[#allocation8 + $0xe4] sm:$0xf]
    %v301 = vld [vmem:[#allocation8 + $0xe8] sm:$0xf]
    %v302 = vld [vmem:[#allocation8 + $0xec] sm:$0xf]
    %v303 = vld [vmem:[#allocation8 + $0xf0] sm:$0xf]
    %v304 = vld [vmem:[#allocation8 + $0xf4] sm:$0xf]
    %v305 = vld [vmem:[#allocation8 + $0xf8] sm:$0xf]
    %v306 = vld [vmem:[#allocation8 + $0xfc] sm:$0xf]
    %v307 = vld [vmem:[#allocation8 + $0x100] sm:$0xf]
    %v308 = vld [vmem:[#allocation8 + $0x104] sm:$0xf]
    %v309 = vld [vmem:[#allocation8 + $0x108] sm:$0xf]
    %v310 = vld [vmem:[#allocation8 + $0x10c] sm:$0xf]
    %v311 = vld [vmem:[#allocation8 + $0x110] sm:$0xf]
    %v312 = vld [vmem:[#allocation8 + $0x114] sm:$0xf]
    %v313 = vld [vmem:[#allocation8 + $0x118] sm:$0xf]
    %v314 = vld [vmem:[#allocation8 + $0x11c] sm:$0xf]
    %v315 = vld [vmem:[#allocation8 + $0x120] sm:$0xf]
    %v316 = vld [vmem:[#allocation8 + $0x124] sm:$0xf]
    %v317 = vld [vmem:[#allocation8 + $0x128] sm:$0xf]
    %v318 = vld [vmem:[#allocation8 + $0x12c] sm:$0xf]
    %v319 = vld [vmem:[#allocation8 + $0x130] sm:$0xf]
    %v320 = vld [vmem:[#allocation8 + $0x134] sm:$0xf]
    %v321 = vld [vmem:[#allocation8 + $0x138] sm:$0xf]
    %v322 = vld [vmem:[#allocation8 + $0x13c] sm:$0xf]
    %v323 = vld [vmem:[#allocation8 + $0x140] sm:$0xf]
    %v324 = vld [vmem:[#allocation8 + $0x144] sm:$0xf]
    %v325 = vld [vmem:[#allocation8 + $0x148] sm:$0xf]
    %v326 = vld [vmem:[#allocation8 + $0x14c] sm:$0xf]
    %v327 = vld [vmem:[#allocation8 + $0x150] sm:$0xf]
    %v328 = vld [vmem:[#allocation8 + $0x154] sm:$0xf]
    %v329 = vld [vmem:[#allocation8 + $0x158] sm:$0xf]
    %v330 = vld [vmem:[#allocation8 + $0x15c] sm:$0xf]
    %v331 = vld [vmem:[#allocation8 + $0x160] sm:$0xf]
    %v332 = vld [vmem:[#allocation8 + $0x164] sm:$0xf]
    %v333 = vld [vmem:[#allocation8 + $0x168] sm:$0xf]
    %v334 = vld [vmem:[#allocation8 + $0x16c] sm:$0xf]
    %v335 = vld [vmem:[#allocation8 + $0x170] sm:$0xf]
    %v336 = vld [vmem:[#allocation8 + $0x174] sm:$0xf]
    %v337 = vld [vmem:[#allocation8 + $0x178] sm:$0xf]
    %v338 = vld [vmem:[#allocation8 + $0x17c] sm:$0xf]
    %v339 = vld [vmem:[#allocation8 + $0x180] sm:$0xf]
    %v340 = vld [vmem:[#allocation8 + $0x184] sm:$0xf]
    %v341 = vld [vmem:[#allocation8 + $0x188] sm:$0xf]
    %v342 = vld [vmem:[#allocation8 + $0x18c] sm:$0xf]
    %v343 = vld [vmem:[#allocation8 + $0x190] sm:$0xf]
    %v344 = vld [vmem:[#allocation8 + $0x194] sm:$0xf]
    %v345 = vld [vmem:[#allocation8 + $0x198] sm:$0xf]
    %v346 = vld [vmem:[#allocation8 + $0x19c] sm:$0xf]
    %v347 = vld [vmem:[#allocation8 + $0x1a0] sm:$0xf]
    %v348 = vld [vmem:[#allocation8 + $0x1a4] sm:$0xf]
    %v349 = vld [vmem:[#allocation8 + $0x1a8] sm:$0xf]
    %v350 = vld [vmem:[#allocation8 + $0x1ac] sm:$0xf]
    %v351 = vld [vmem:[#allocation8 + $0x1b0] sm:$0xf]
    %v352 = vld [vmem:[#allocation8 + $0x1b4] sm:$0xf]
    %v353 = vld [vmem:[#allocation8 + $0x1b8] sm:$0xf]
    %v354 = vld [vmem:[#allocation8 + $0x1bc] sm:$0xf]
    %v355 = vld [vmem:[#allocation8 + $0x1c0] sm:$0xf]
    %v356 = vld [vmem:[#allocation8 + $0x1c4] sm:$0xf]
    %v357 = vld [vmem:[#allocation8 + $0x1c8] sm:$0xf]
    %v358 = vld [vmem:[#allocation8 + $0x1cc] sm:$0xf]
    %v359 = vld [vmem:[#allocation8 + $0x1d0] sm:$0xf]
    %v360 = vld [vmem:[#allocation8 + $0x1d4] sm:$0xf]
    %v361 = vld [vmem:[#allocation8 + $0x1d8] sm:$0xf]
    %v362 = vld [vmem:[#allocation8 + $0x1dc] sm:$0xf]
    %v363 = vld [vmem:[#allocation8 + $0x1e0] sm:$0xf]
    %v364 = vld [vmem:[#allocation8 + $0x1e4] sm:$0xf]
    %v365 = vld [vmem:[#allocation8 + $0x1e8] sm:$0xf]
    %v366 = vld [vmem:[#allocation8 + $0x1ec] sm:$0xf]
    %v367 = vld [vmem:[#allocation8 + $0x1f0] sm:$0xf]
    %v368 = vld [vmem:[#allocation8 + $0x1f4] sm:$0xf]
    %v369 = vld [vmem:[#allocation8 + $0x1f8] sm:$0xf]
    %v370 = vld [vmem:[#allocation8 + $0x1fc] sm:$0xf]
    %v499 = vunpack.c.l.b16 %v243
    %v500 = vunpack.c.l.b16 %v244
    %v501 = vunpack.c.l.b16 %v245
    %v502 = vunpack.c.l.b16 %v246
    %v503 = vunpack.c.l.b16 %v247
    %v504 = vunpack.c.l.b16 %v248
    %v505 = vunpack.c.l.b16 %v249
    %v506 = vunpack.c.l.b16 %v250
    %v507 = vunpack.c.l.b16 %v251
    %v508 = vunpack.c.l.b16 %v252
    %v509 = vunpack.c.l.b16 %v253
    %v510 = vunpack.c.l.b16 %v254
    %v511 = vunpack.c.l.b16 %v255
    %v512 = vunpack.c.l.b16 %v256
    %v513 = vunpack.c.l.b16 %v257
    %v514 = vunpack.c.l.b16 %v258
    %v515 = vunpack.c.l.b16 %v259
    %v516 = vunpack.c.l.b16 %v260
    %v517 = vunpack.c.l.b16 %v261
    %v518 = vunpack.c.l.b16 %v262
    %v519 = vunpack.c.l.b16 %v263
    %v520 = vunpack.c.l.b16 %v264
    %v521 = vunpack.c.l.b16 %v265
    %v522 = vunpack.c.l.b16 %v266
    %v523 = vunpack.c.l.b16 %v267
    %v524 = vunpack.c.l.b16 %v268
    %v525 = vunpack.c.l.b16 %v269
    %v526 = vunpack.c.l.b16 %v270
    %v527 = vunpack.c.l.b16 %v271
    %v528 = vunpack.c.l.b16 %v272
    %v529 = vunpack.c.l.b16 %v273
    %v530 = vunpack.c.l.b16 %v274
    %v531 = vunpack.c.l.b16 %v275
    %v532 = vunpack.c.l.b16 %v276
    %v533 = vunpack.c.l.b16 %v277
    %v534 = vunpack.c.l.b16 %v278
    %v535 = vunpack.c.l.b16 %v279
    %v536 = vunpack.c.l.b16 %v280
    %v537 = vunpack.c.l.b16 %v281
    %v538 = vunpack.c.l.b16 %v282
    %v539 = vunpack.c.l.b16 %v283
    %v540 = vunpack.c.l.b16 %v284
    %v541 = vunpack.c.l.b16 %v285
    %v542 = vunpack.c.l.b16 %v286
    %v543 = vunpack.c.l.b16 %v287
    %v544 = vunpack.c.l.b16 %v288
    %v545 = vunpack.c.l.b16 %v289
    %v546 = vunpack.c.l.b16 %v290
    %v547 = vunpack.c.l.b16 %v291
    %v548 = vunpack.c.l.b16 %v292
    %v549 = vunpack.c.l.b16 %v293
    %v550 = vunpack.c.l.b16 %v294
    %v551 = vunpack.c.l.b16 %v295
    %v552 = vunpack.c.l.b16 %v296
    %v553 = vunpack.c.l.b16 %v297
    %v554 = vunpack.c.l.b16 %v298
    %v555 = vunpack.c.l.b16 %v299
    %v556 = vunpack.c.l.b16 %v300
    %v557 = vunpack.c.l.b16 %v301
    %v558 = vunpack.c.l.b16 %v302
    %v559 = vunpack.c.l.b16 %v303
    %v560 = vunpack.c.l.b16 %v304
    %v561 = vunpack.c.l.b16 %v305
    %v562 = vunpack.c.l.b16 %v306
    %v563 = vunpack.c.l.b16 %v307
    %v564 = vunpack.c.l.b16 %v308
    %v565 = vunpack.c.l.b16 %v309
    %v566 = vunpack.c.l.b16 %v310
    %v567 = vunpack.c.l.b16 %v311
    %v568 = vunpack.c.l.b16 %v312
    %v569 = vunpack.c.l.b16 %v313
    %v570 = vunpack.c.l.b16 %v314
    %v571 = vunpack.c.l.b16 %v315
    %v572 = vunpack.c.l.b16 %v316
    %v573 = vunpack.c.l.b16 %v317
    %v574 = vunpack.c.l.b16 %v318
    %v575 = vunpack.c.l.b16 %v319
    %v576 = vunpack.c.l.b16 %v320
    %v577 = vunpack.c.l.b16 %v321
    %v578 = vunpack.c.l.b16 %v322
    %v579 = vunpack.c.l.b16 %v323
    %v580 = vunpack.c.l.b16 %v324
    %v581 = vunpack.c.l.b16 %v325
    %v582 = vunpack.c.l.b16 %v326
    %v583 = vunpack.c.l.b16 %v327
    %v584 = vunpack.c.l.b16 %v328
    %v585 = vunpack.c.l.b16 %v329
    %v586 = vunpack.c.l.b16 %v330
    %v587 = vunpack.c.l.b16 %v331
    %v588 = vunpack.c.l.b16 %v332
    %v589 = vunpack.c.l.b16 %v333
    %v590 = vunpack.c.l.b16 %v334
    %v591 = vunpack.c.l.b16 %v335
    %v592 = vunpack.c.l.b16 %v336
    %v593 = vunpack.c.l.b16 %v337
    %v594 = vunpack.c.l.b16 %v338
    %v595 = vunpack.c.l.b16 %v339
    %v596 = vunpack.c.l.b16 %v340
    %v597 = vunpack.c.l.b16 %v341
    %v598 = vunpack.c.l.b16 %v342
    %v599 = vunpack.c.l.b16 %v343
    %v600 = vunpack.c.l.b16 %v344
    %v601 = vunpack.c.l.b16 %v345
    %v602 = vunpack.c.l.b16 %v346
    %v603 = vunpack.c.l.b16 %v347
    %v604 = vunpack.c.l.b16 %v348
    %v605 = vunpack.c.l.b16 %v349
    %v606 = vunpack.c.l.b16 %v350
    %v607 = vunpack.c.l.b16 %v351
    %v608 = vunpack.c.l.b16 %v352
    %v609 = vunpack.c.l.b16 %v353
    %v610 = vunpack.c.l.b16 %v354
    %v611 = vunpack.c.l.b16 %v355
    %v612 = vunpack.c.l.b16 %v356
    %v613 = vunpack.c.l.b16 %v357
    %v614 = vunpack.c.l.b16 %v358
    %v615 = vunpack.c.l.b16 %v359
    %v616 = vunpack.c.l.b16 %v360
    %v617 = vunpack.c.l.b16 %v361
    %v618 = vunpack.c.l.b16 %v362
    %v619 = vunpack.c.l.b16 %v363
    %v620 = vunpack.c.l.b16 %v364
    %v621 = vunpack.c.l.b16 %v365
    %v622 = vunpack.c.l.b16 %v366
    %v623 = vunpack.c.l.b16 %v367
    %v624 = vunpack.c.l.b16 %v368
    %v625 = vunpack.c.l.b16 %v369
    %v626 = vunpack.c.l.b16 %v370
    %v627 = vpack.c.b16 %v500, %v499
    %v628 = vpack.c.b16 %v502, %v501
    %v629 = vpack.c.b16 %v504, %v503
    %v630 = vpack.c.b16 %v506, %v505
    %v631 = vpack.c.b16 %v508, %v507
    %v632 = vpack.c.b16 %v510, %v509
    %v633 = vpack.c.b16 %v512, %v511
    %v634 = vpack.c.b16 %v514, %v513
    %v635 = vpack.c.b16 %v516, %v515
    %v636 = vpack.c.b16 %v518, %v517
    %v637 = vpack.c.b16 %v520, %v519
    %v638 = vpack.c.b16 %v522, %v521
    %v639 = vpack.c.b16 %v524, %v523
    %v640 = vpack.c.b16 %v526, %v525
    %v641 = vpack.c.b16 %v528, %v527
    %v642 = vpack.c.b16 %v530, %v529
    %v643 = vpack.c.b16 %v532, %v531
    %v644 = vpack.c.b16 %v534, %v533
    %v645 = vpack.c.b16 %v536, %v535
    %v646 = vpack.c.b16 %v538, %v537
    %v647 = vpack.c.b16 %v540, %v539
    %v648 = vpack.c.b16 %v542, %v541
    %v649 = vpack.c.b16 %v544, %v543
    %v650 = vpack.c.b16 %v546, %v545
    %v651 = vpack.c.b16 %v548, %v547
    %v652 = vpack.c.b16 %v550, %v549
    %v653 = vpack.c.b16 %v552, %v551
    %v654 = vpack.c.b16 %v554, %v553
    %v655 = vpack.c.b16 %v556, %v555
    %v656 = vpack.c.b16 %v558, %v557
    %v657 = vpack.c.b16 %v560, %v559
    %v658 = vpack.c.b16 %v562, %v561
    %v659 = vpack.c.b16 %v564, %v563
    %v660 = vpack.c.b16 %v566, %v565
    %v661 = vpack.c.b16 %v568, %v567
    %v662 = vpack.c.b16 %v570, %v569
    %v663 = vpack.c.b16 %v572, %v571
    %v664 = vpack.c.b16 %v574, %v573
    %v665 = vpack.c.b16 %v576, %v575
    %v666 = vpack.c.b16 %v578, %v577
    %v667 = vpack.c.b16 %v580, %v579
    %v668 = vpack.c.b16 %v582, %v581
    %v669 = vpack.c.b16 %v584, %v583
    %v670 = vpack.c.b16 %v586, %v585
    %v671 = vpack.c.b16 %v588, %v587
    %v672 = vpack.c.b16 %v590, %v589
    %v673 = vpack.c.b16 %v592, %v591
    %v674 = vpack.c.b16 %v594, %v593
    %v675 = vpack.c.b16 %v596, %v595
    %v676 = vpack.c.b16 %v598, %v597
    %v677 = vpack.c.b16 %v600, %v599
    %v678 = vpack.c.b16 %v602, %v601
    %v679 = vpack.c.b16 %v604, %v603
    %v680 = vpack.c.b16 %v606, %v605
    %v681 = vpack.c.b16 %v608, %v607
    %v682 = vpack.c.b16 %v610, %v609
    %v683 = vpack.c.b16 %v612, %v611
    %v684 = vpack.c.b16 %v614, %v613
    %v685 = vpack.c.b16 %v616, %v615
    %v686 = vpack.c.b16 %v618, %v617
    %v687 = vpack.c.b16 %v620, %v619
    %v688 = vpack.c.b16 %v622, %v621
    %v689 = vpack.c.b16 %v624, %v623
    %v690 = vpack.c.b16 %v626, %v625
    %755 = vmatpush.bf16.msra.mxu0 %v634
    %756 = vmatpush.bf16.msra.mxu0 %v633
    %757 = vmatpush.bf16.msra.mxu0 %v632
    %758 = vmatpush.bf16.msra.mxu0 %v631
    %759 = vmatpush.bf16.msra.mxu0 %v630
    %760 = vmatpush.bf16.msra.mxu0 %v629
    %761 = vmatpush.bf16.msra.mxu0 %v628
    %762 = vmatpush.bf16.msra.mxu0 %v627
    %763 = vmatmul.bf16.gmra.mxu0 %v107
    %v764 = vpop.f32.mrf.mxu0
    %v765 = vadd.f32 0.0, %v764
    %v766 = vpop.f32.mrf.mxu0
    %767 = vdwg.mxu0
    %768 = vmatpush.bf16.msra.mxu0 %v642
    %769 = vmatpush.bf16.msra.mxu0 %v641
    %770 = vmatpush.bf16.msra.mxu0 %v640
    %771 = vmatpush.bf16.msra.mxu0 %v639
    %772 = vmatpush.bf16.msra.mxu0 %v638
    %773 = vmatpush.bf16.msra.mxu0 %v637
    %774 = vmatpush.bf16.msra.mxu0 %v636
    %775 = vmatpush.bf16.msra.mxu0 %v635
    %776 = vmatmul.bf16.gmra.mxu0 %v108
    %v777 = vpop.f32.mrf.mxu0
    %v778 = vadd.f32 %v765, %v777
    %v779 = vpop.f32.mrf.mxu0
    %780 = vdwg.mxu0
    %781 = vmatpush.bf16.msra.mxu0 %v650
    %782 = vmatpush.bf16.msra.mxu0 %v649
    %783 = vmatpush.bf16.msra.mxu0 %v648
    %784 = vmatpush.bf16.msra.mxu0 %v647
    %785 = vmatpush.bf16.msra.mxu0 %v646
    %786 = vmatpush.bf16.msra.mxu0 %v645
    %787 = vmatpush.bf16.msra.mxu0 %v644
    %788 = vmatpush.bf16.msra.mxu0 %v643
    %789 = vmatmul.bf16.gmra.mxu0 %v109
    %v790 = vpop.f32.mrf.mxu0
    %v791 = vadd.f32 %v778, %v790
    %v792 = vpop.f32.mrf.mxu0
    %793 = vdwg.mxu0
    %794 = vmatpush.bf16.msra.mxu0 %v658
    %795 = vmatpush.bf16.msra.mxu0 %v657
    %796 = vmatpush.bf16.msra.mxu0 %v656
    %797 = vmatpush.bf16.msra.mxu0 %v655
    %798 = vmatpush.bf16.msra.mxu0 %v654
    %799 = vmatpush.bf16.msra.mxu0 %v653
    %800 = vmatpush.bf16.msra.mxu0 %v652
    %801 = vmatpush.bf16.msra.mxu0 %v651
    %802 = vmatmul.bf16.gmra.mxu0 %v110
    %v803 = vpop.f32.mrf.mxu0
    %v804 = vadd.f32 %v791, %v803
    %v805 = vpop.f32.mrf.mxu0
    %806 = vdwg.mxu0
    %807 = vmatpush.bf16.msra.mxu0 %v666
    %808 = vmatpush.bf16.msra.mxu0 %v665
    %809 = vmatpush.bf16.msra.mxu0 %v664
    %810 = vmatpush.bf16.msra.mxu0 %v663
    %811 = vmatpush.bf16.msra.mxu0 %v662
    %812 = vmatpush.bf16.msra.mxu0 %v661
    %813 = vmatpush.bf16.msra.mxu0 %v660
    %814 = vmatpush.bf16.msra.mxu0 %v659
    %815 = vmatmul.bf16.gmra.mxu0 %v111
    %v816 = vpop.f32.mrf.mxu0
    %v817 = vadd.f32 %v804, %v816
    %v818 = vpop.f32.mrf.mxu0
    %819 = vdwg.mxu0
    %820 = vmatpush.bf16.msra.mxu0 %v674
    %821 = vmatpush.bf16.msra.mxu0 %v673
    %822 = vmatpush.bf16.msra.mxu0 %v672
    %823 = vmatpush.bf16.msra.mxu0 %v671
    %824 = vmatpush.bf16.msra.mxu0 %v670
    %825 = vmatpush.bf16.msra.mxu0 %v669
    %826 = vmatpush.bf16.msra.mxu0 %v668
    %827 = vmatpush.bf16.msra.mxu0 %v667
    %828 = vmatmul.bf16.gmra.mxu0 %v112
    %v829 = vpop.f32.mrf.mxu0
    %v830 = vadd.f32 %v817, %v829
    %v831 = vpop.f32.mrf.mxu0
    %832 = vdwg.mxu0
    %833 = vmatpush.bf16.msra.mxu0 %v682
    %834 = vmatpush.bf16.msra.mxu0 %v681
    %835 = vmatpush.bf16.msra.mxu0 %v680
    %836 = vmatpush.bf16.msra.mxu0 %v679
    %837 = vmatpush.bf16.msra.mxu0 %v678
    %838 = vmatpush.bf16.msra.mxu0 %v677
    %839 = vmatpush.bf16.msra.mxu0 %v676
    %840 = vmatpush.bf16.msra.mxu0 %v675
    %841 = vmatmul.bf16.gmra.mxu0 %v113
    %v842 = vpop.f32.mrf.mxu0
    %v843 = vadd.f32 %v830, %v842
    %v844 = vpop.f32.mrf.mxu0
    %845 = vdwg.mxu0
    %846 = vmatpush.bf16.msra.mxu0 %v690
    %847 = vmatpush.bf16.msra.mxu0 %v689
    %848 = vmatpush.bf16.msra.mxu0 %v688
    %849 = vmatpush.bf16.msra.mxu0 %v687
    %850 = vmatpush.bf16.msra.mxu0 %v686
    %851 = vmatpush.bf16.msra.mxu0 %v685
    %852 = vmatpush.bf16.msra.mxu0 %v684
    %853 = vmatpush.bf16.msra.mxu0 %v683
    %854 = vmatmul.bf16.gmra.mxu0 %v114
    %v855 = vpop.f32.mrf.mxu0
    %v856 = vadd.f32 %v843, %v855
    %v857 = vpop.f32.mrf.mxu0
    %858 = vdwg.mxu0
    %v987 = vunpack.c.l.b16 %v115
    %v988 = vunpack.c.l.b16 %v116
    %v989 = vunpack.c.l.b16 %v117
    %v990 = vunpack.c.l.b16 %v118
    %v991 = vunpack.c.l.b16 %v119
    %v992 = vunpack.c.l.b16 %v120
    %v993 = vunpack.c.l.b16 %v121
    %v994 = vunpack.c.l.b16 %v122
    %v995 = vunpack.c.l.b16 %v123
    %v996 = vunpack.c.l.b16 %v124
    %v997 = vunpack.c.l.b16 %v125
    %v998 = vunpack.c.l.b16 %v126
    %v999 = vunpack.c.l.b16 %v127
    %v1000 = vunpack.c.l.b16 %v128
    %v1001 = vunpack.c.l.b16 %v129
    %v1002 = vunpack.c.l.b16 %v130
    %v1003 = vunpack.c.l.b16 %v131
    %v1004 = vunpack.c.l.b16 %v132
    %v1005 = vunpack.c.l.b16 %v133
    %v1006 = vunpack.c.l.b16 %v134
    %v1007 = vunpack.c.l.b16 %v135
    %v1008 = vunpack.c.l.b16 %v136
    %v1009 = vunpack.c.l.b16 %v137
    %v1010 = vunpack.c.l.b16 %v138
    %v1011 = vunpack.c.l.b16 %v139
    %v1012 = vunpack.c.l.b16 %v140
    %v1013 = vunpack.c.l.b16 %v141
    %v1014 = vunpack.c.l.b16 %v142
    %v1015 = vunpack.c.l.b16 %v143
    %v1016 = vunpack.c.l.b16 %v144
    %v1017 = vunpack.c.l.b16 %v145
    %v1018 = vunpack.c.l.b16 %v146
    %v1019 = vunpack.c.l.b16 %v147
    %v1020 = vunpack.c.l.b16 %v148
    %v1021 = vunpack.c.l.b16 %v149
    %v1022 = vunpack.c.l.b16 %v150
    %v1023 = vunpack.c.l.b16 %v151
    %v1024 = vunpack.c.l.b16 %v152
    %v1025 = vunpack.c.l.b16 %v153
    %v1026 = vunpack.c.l.b16 %v154
    %v1027 = vunpack.c.l.b16 %v155
    %v1028 = vunpack.c.l.b16 %v156
    %v1029 = vunpack.c.l.b16 %v157
    %v1030 = vunpack.c.l.b16 %v158
    %v1031 = vunpack.c.l.b16 %v159
    %v1032 = vunpack.c.l.b16 %v160
    %v1033 = vunpack.c.l.b16 %v161
    %v1034 = vunpack.c.l.b16 %v162
    %v1035 = vunpack.c.l.b16 %v163
    %v1036 = vunpack.c.l.b16 %v164
    %v1037 = vunpack.c.l.b16 %v165
    %v1038 = vunpack.c.l.b16 %v166
    %v1039 = vunpack.c.l.b16 %v167
    %v1040 = vunpack.c.l.b16 %v168
    %v1041 = vunpack.c.l.b16 %v169
    %v1042 = vunpack.c.l.b16 %v170
    %v1043 = vunpack.c.l.b16 %v171
    %v1044 = vunpack.c.l.b16 %v172
    %v1045 = vunpack.c.l.b16 %v173
    %v1046 = vunpack.c.l.b16 %v174
    %v1047 = vunpack.c.l.b16 %v175
    %v1048 = vunpack.c.l.b16 %v176
    %v1049 = vunpack.c.l.b16 %v177
    %v1050 = vunpack.c.l.b16 %v178
    %v1051 = vunpack.c.l.b16 %v179
    %v1052 = vunpack.c.l.b16 %v180
    %v1053 = vunpack.c.l.b16 %v181
    %v1054 = vunpack.c.l.b16 %v182
    %v1055 = vunpack.c.l.b16 %v183
    %v1056 = vunpack.c.l.b16 %v184
    %v1057 = vunpack.c.l.b16 %v185
    %v1058 = vunpack.c.l.b16 %v186
    %v1059 = vunpack.c.l.b16 %v187
    %v1060 = vunpack.c.l.b16 %v188
    %v1061 = vunpack.c.l.b16 %v189
    %v1062 = vunpack.c.l.b16 %v190
    %v1063 = vunpack.c.l.b16 %v191
    %v1064 = vunpack.c.l.b16 %v192
    %v1065 = vunpack.c.l.b16 %v193
    %v1066 = vunpack.c.l.b16 %v194
    %v1067 = vunpack.c.l.b16 %v195
    %v1068 = vunpack.c.l.b16 %v196
    %v1069 = vunpack.c.l.b16 %v197
    %v1070 = vunpack.c.l.b16 %v198
    %v1071 = vunpack.c.l.b16 %v199
    %v1072 = vunpack.c.l.b16 %v200
    %v1073 = vunpack.c.l.b16 %v201
    %v1074 = vunpack.c.l.b16 %v202
    %v1075 = vunpack.c.l.b16 %v203
    %v1076 = vunpack.c.l.b16 %v204
    %v1077 = vunpack.c.l.b16 %v205
    %v1078 = vunpack.c.l.b16 %v206
    %v1079 = vunpack.c.l.b16 %v207
    %v1080 = vunpack.c.l.b16 %v208
    %v1081 = vunpack.c.l.b16 %v209
    %v1082 = vunpack.c.l.b16 %v210
    %v1083 = vunpack.c.l.b16 %v211
    %v1084 = vunpack.c.l.b16 %v212
    %v1085 = vunpack.c.l.b16 %v213
    %v1086 = vunpack.c.l.b16 %v214
    %v1087 = vunpack.c.l.b16 %v215
    %v1088 = vunpack.c.l.b16 %v216
    %v1089 = vunpack.c.l.b16 %v217
    %v1090 = vunpack.c.l.b16 %v218
    %v1091 = vunpack.c.l.b16 %v219
    %v1092 = vunpack.c.l.b16 %v220
    %v1093 = vunpack.c.l.b16 %v221
    %v1094 = vunpack.c.l.b16 %v222
    %v1095 = vunpack.c.l.b16 %v223
    %v1096 = vunpack.c.l.b16 %v224
    %v1097 = vunpack.c.l.b16 %v225
    %v1098 = vunpack.c.l.b16 %v226
    %v1099 = vunpack.c.l.b16 %v227
    %v1100 = vunpack.c.l.b16 %v228
    %v1101 = vunpack.c.l.b16 %v229
    %v1102 = vunpack.c.l.b16 %v230
    %v1103 = vunpack.c.l.b16 %v231
    %v1104 = vunpack.c.l.b16 %v232
    %v1105 = vunpack.c.l.b16 %v233
    %v1106 = vunpack.c.l.b16 %v234
    %v1107 = vunpack.c.l.b16 %v235
    %v1108 = vunpack.c.l.b16 %v236
    %v1109 = vunpack.c.l.b16 %v237
    %v1110 = vunpack.c.l.b16 %v238
    %v1111 = vunpack.c.l.b16 %v239
    %v1112 = vunpack.c.l.b16 %v240
    %v1113 = vunpack.c.l.b16 %v241
    %v1114 = vunpack.c.l.b16 %v242
    %v1115 = vpack.c.b16 %v988, %v987
    %v1116 = vpack.c.b16 %v990, %v989
    %v1117 = vpack.c.b16 %v992, %v991
    %v1118 = vpack.c.b16 %v994, %v993
    %v1119 = vpack.c.b16 %v996, %v995
    %v1120 = vpack.c.b16 %v998, %v997
    %v1121 = vpack.c.b16 %v1000, %v999
    %v1122 = vpack.c.b16 %v1002, %v1001
    %v1123 = vpack.c.b16 %v1004, %v1003
    %v1124 = vpack.c.b16 %v1006, %v1005
    %v1125 = vpack.c.b16 %v1008, %v1007
    %v1126 = vpack.c.b16 %v1010, %v1009
    %v1127 = vpack.c.b16 %v1012, %v1011
    %v1128 = vpack.c.b16 %v1014, %v1013
    %v1129 = vpack.c.b16 %v1016, %v1015
    %v1130 = vpack.c.b16 %v1018, %v1017
    %v1131 = vpack.c.b16 %v1020, %v1019
    %v1132 = vpack.c.b16 %v1022, %v1021
    %v1133 = vpack.c.b16 %v1024, %v1023
    %v1134 = vpack.c.b16 %v1026, %v1025
    %v1135 = vpack.c.b16 %v1028, %v1027
    %v1136 = vpack.c.b16 %v1030, %v1029
    %v1137 = vpack.c.b16 %v1032, %v1031
    %v1138 = vpack.c.b16 %v1034, %v1033
    %v1139 = vpack.c.b16 %v1036, %v1035
    %v1140 = vpack.c.b16 %v1038, %v1037
    %v1141 = vpack.c.b16 %v1040, %v1039
    %v1142 = vpack.c.b16 %v1042, %v1041
    %v1143 = vpack.c.b16 %v1044, %v1043
    %v1144 = vpack.c.b16 %v1046, %v1045
    %v1145 = vpack.c.b16 %v1048, %v1047
    %v1146 = vpack.c.b16 %v1050, %v1049
    %v1147 = vpack.c.b16 %v1052, %v1051
    %v1148 = vpack.c.b16 %v1054, %v1053
    %v1149 = vpack.c.b16 %v1056, %v1055
    %v1150 = vpack.c.b16 %v1058, %v1057
    %v1151 = vpack.c.b16 %v1060, %v1059
    %v1152 = vpack.c.b16 %v1062, %v1061
    %v1153 = vpack.c.b16 %v1064, %v1063
    %v1154 = vpack.c.b16 %v1066, %v1065
    %v1155 = vpack.c.b16 %v1068, %v1067
    %v1156 = vpack.c.b16 %v1070, %v1069
    %v1157 = vpack.c.b16 %v1072, %v1071
    %v1158 = vpack.c.b16 %v1074, %v1073
    %v1159 = vpack.c.b16 %v1076, %v1075
    %v1160 = vpack.c.b16 %v1078, %v1077
    %v1161 = vpack.c.b16 %v1080, %v1079
    %v1162 = vpack.c.b16 %v1082, %v1081
    %v1163 = vpack.c.b16 %v1084, %v1083
    %v1164 = vpack.c.b16 %v1086, %v1085
    %v1165 = vpack.c.b16 %v1088, %v1087
    %v1166 = vpack.c.b16 %v1090, %v1089
    %v1167 = vpack.c.b16 %v1092, %v1091
    %v1168 = vpack.c.b16 %v1094, %v1093
    %v1169 = vpack.c.b16 %v1096, %v1095
    %v1170 = vpack.c.b16 %v1098, %v1097
    %v1171 = vpack.c.b16 %v1100, %v1099
    %v1172 = vpack.c.b16 %v1102, %v1101
    %v1173 = vpack.c.b16 %v1104, %v1103
    %v1174 = vpack.c.b16 %v1106, %v1105
    %v1175 = vpack.c.b16 %v1108, %v1107
    %v1176 = vpack.c.b16 %v1110, %v1109
    %v1177 = vpack.c.b16 %v1112, %v1111
    %v1178 = vpack.c.b16 %v1114, %v1113
    %1243 = vmatpush.bf16.msra.mxu0 %v1122
    %1244 = vmatpush.bf16.msra.mxu0 %v1121
    %1245 = vmatpush.bf16.msra.mxu0 %v1120
    %1246 = vmatpush.bf16.msra.mxu0 %v1119
    %1247 = vmatpush.bf16.msra.mxu0 %v1118
    %1248 = vmatpush.bf16.msra.mxu0 %v1117
    %1249 = vmatpush.bf16.msra.mxu0 %v1116
    %1250 = vmatpush.bf16.msra.mxu0 %v1115
    %1251 = vmatmul.bf16.gmra.mxu0 %v91
    %v1252 = vpop.f32.mrf.mxu0
    %v1253 = vadd.f32 %v856, %v1252
    %v1254 = vpop.f32.mrf.mxu0
    %1255 = vdwg.mxu0
    %1256 = vmatpush.bf16.msra.mxu0 %v1130
    %1257 = vmatpush.bf16.msra.mxu0 %v1129
    %1258 = vmatpush.bf16.msra.mxu0 %v1128
    %1259 = vmatpush.bf16.msra.mxu0 %v1127
    %1260 = vmatpush.bf16.msra.mxu0 %v1126
    %1261 = vmatpush.bf16.msra.mxu0 %v1125
    %1262 = vmatpush.bf16.msra.mxu0 %v1124
    %1263 = vmatpush.bf16.msra.mxu0 %v1123
    %1264 = vmatmul.bf16.gmra.mxu0 %v92
    %v1265 = vpop.f32.mrf.mxu0
    %v1266 = vadd.f32 %v1253, %v1265
    %v1267 = vpop.f32.mrf.mxu0
    %1268 = vdwg.mxu0
    %1269 = vmatpush.bf16.msra.mxu0 %v1138
    %1270 = vmatpush.bf16.msra.mxu0 %v1137
    %1271 = vmatpush.bf16.msra.mxu0 %v1136
    %1272 = vmatpush.bf16.msra.mxu0 %v1135
    %1273 = vmatpush.bf16.msra.mxu0 %v1134
    %1274 = vmatpush.bf16.msra.mxu0 %v1133
    %1275 = vmatpush.bf16.msra.mxu0 %v1132
    %1276 = vmatpush.bf16.msra.mxu0 %v1131
    %1277 = vmatmul.bf16.gmra.mxu0 %v93
    %v1278 = vpop.f32.mrf.mxu0
    %v1279 = vadd.f32 %v1266, %v1278
    %v1280 = vpop.f32.mrf.mxu0
    %1281 = vdwg.mxu0
    %1282 = vmatpush.bf16.msra.mxu0 %v1146
    %1283 = vmatpush.bf16.msra.mxu0 %v1145
    %1284 = vmatpush.bf16.msra.mxu0 %v1144
    %1285 = vmatpush.bf16.msra.mxu0 %v1143
    %1286 = vmatpush.bf16.msra.mxu0 %v1142
    %1287 = vmatpush.bf16.msra.mxu0 %v1141
    %1288 = vmatpush.bf16.msra.mxu0 %v1140
    %1289 = vmatpush.bf16.msra.mxu0 %v1139
    %1290 = vmatmul.bf16.gmra.mxu0 %v94
    %v1291 = vpop.f32.mrf.mxu0
    %v1292 = vadd.f32 %v1279, %v1291
    %v1293 = vpop.f32.mrf.mxu0
    %1294 = vdwg.mxu0
    %1295 = vmatpush.bf16.msra.mxu0 %v1154
    %1296 = vmatpush.bf16.msra.mxu0 %v1153
    %1297 = vmatpush.bf16.msra.mxu0 %v1152
    %1298 = vmatpush.bf16.msra.mxu0 %v1151
    %1299 = vmatpush.bf16.msra.mxu0 %v1150
    %1300 = vmatpush.bf16.msra.mxu0 %v1149
    %1301 = vmatpush.bf16.msra.mxu0 %v1148
    %1302 = vmatpush.bf16.msra.mxu0 %v1147
    %1303 = vmatmul.bf16.gmra.mxu0 %v95
    %v1304 = vpop.f32.mrf.mxu0
    %v1305 = vadd.f32 %v1292, %v1304
    %v1306 = vpop.f32.mrf.mxu0
    %1307 = vdwg.mxu0
    %1308 = vmatpush.bf16.msra.mxu0 %v1162
    %1309 = vmatpush.bf16.msra.mxu0 %v1161
    %1310 = vmatpush.bf16.msra.mxu0 %v1160
    %1311 = vmatpush.bf16.msra.mxu0 %v1159
    %1312 = vmatpush.bf16.msra.mxu0 %v1158
    %1313 = vmatpush.bf16.msra.mxu0 %v1157
    %1314 = vmatpush.bf16.msra.mxu0 %v1156
    %1315 = vmatpush.bf16.msra.mxu0 %v1155
    %1316 = vmatmul.bf16.gmra.mxu0 %v96
    %v1317 = vpop.f32.mrf.mxu0
    %v1318 = vadd.f32 %v1305, %v1317
    %v1319 = vpop.f32.mrf.mxu0
    %1320 = vdwg.mxu0
    %1321 = vmatpush.bf16.msra.mxu0 %v1170
    %1322 = vmatpush.bf16.msra.mxu0 %v1169
    %1323 = vmatpush.bf16.msra.mxu0 %v1168
    %1324 = vmatpush.bf16.msra.mxu0 %v1167
    %1325 = vmatpush.bf16.msra.mxu0 %v1166
    %1326 = vmatpush.bf16.msra.mxu0 %v1165
    %1327 = vmatpush.bf16.msra.mxu0 %v1164
    %1328 = vmatpush.bf16.msra.mxu0 %v1163
    %1329 = vmatmul.bf16.gmra.mxu0 %v97
    %v1330 = vpop.f32.mrf.mxu0
    %v1331 = vadd.f32 %v1318, %v1330
    %v1332 = vpop.f32.mrf.mxu0
    %1333 = vdwg.mxu0
    %1334 = vmatpush.bf16.msra.mxu0 %v1178
    %1335 = vmatpush.bf16.msra.mxu0 %v1177
    %1336 = vmatpush.bf16.msra.mxu0 %v1176
    %1337 = vmatpush.bf16.msra.mxu0 %v1175
    %1338 = vmatpush.bf16.msra.mxu0 %v1174
    %1339 = vmatpush.bf16.msra.mxu0 %v1173
    %1340 = vmatpush.bf16.msra.mxu0 %v1172
    %1341 = vmatpush.bf16.msra.mxu0 %v1171
    %1342 = vmatmul.bf16.gmra.mxu0 %v98
    %v1343 = vpop.f32.mrf.mxu0
    %v1344 = vadd.f32 %v1331, %v1343
    %v1345 = vpop.f32.mrf.mxu0
    %1346 = vdwg.mxu0
    %v1347 = vld [vmem:[%s4] sm:$0x1]
    %v1349 = vperm.slane %v1347, 0
    %v1351 = vadd.f32 %v1344, %v1349
    %1352 = vst [vmem:[#allocation10] sm:$0xff] %v1351
    %vm1353 = vcmask 1043456
    %v1354 = vsel %vm1353, %v1351, 0.0
    %v1355 = vrot.slane %v1354, 4
    %v1356 = vadd.f32 %v1354, %v1355
    %v1357 = vrot.slane %v1356, 2
    %v1358 = vadd.f32 %v1356, %v1357
    %v1359 = vrot.slane %v1358, 1
    %v1360 = vadd.f32 %v1358, %v1359
    %v1361 = vrcp.pop 4.0
    %v1362 = vmul.f32 4.0, %v1361
    %v1363 = vsub.f32 1.0, %v1362
    %v1364 = vmul.f32 %v1361, %v1363
    %v1365 = vadd.f32 %v1361, %v1364
    %vm1366 = vweird.f32 %v1361
    %v1367 = vsel %vm1366, %v1361, %v1365
    %v1368 = vmul.f32 %v1360, %v1367
    %1369 = vst [vmem:[#allocation11] sm:$0x1] %v1368
    %v1371 = vrot.slane %v1351, 4
    %v1373 = vsel %vm1353, %v1371, 0.0
    %v1374 = vrot.slane %v1373, 4
    %v1375 = vadd.f32 %v1373, %v1374
    %v1376 = vrot.slane %v1375, 2
    %v1377 = vadd.f32 %v1375, %v1376
    %v1378 = vrot.slane %v1377, 1
    %v1379 = vadd.f32 %v1377, %v1378
    %v1380 = vmul.f32 %v1379, %v1367
    %1381 = vst [vmem:[#allocation11 + $0x1] sm:$0x1] %v1380
    // Predicated region
    $region38: #{tpu_custom_call.1} parent=1 // pred_check
      _
    $region39: #{tpu_custom_call.1} parent=1 // pred_check_branch
      %1383 = sbr.rel (0) target = $region41
    $region40: #{tpu_custom_call.1} parent=1 // pred_region
      %1385 = vsyncadd [#allocation4], 0
      %s1387 = sshll.u32 [#allocation10], 4
      %s1388 = int_to_ptr.vmem [resolvable:$true] %s1387
      %s1389 = sshll.u32 %s5, 4
      %s1390 = int_to_ptr.hbm [resolvable:$true] %s1389
      %1392 = dma.vmem_to_hbm [thread:$0]  %s1388, 128, %s1390, [#allocation4]
    $region41: #{tpu_custom_call.1} parent=1 // pred_fallthru
      _
    // Predicated region
    $region42: #{tpu_custom_call.1} parent=1 // pred_check
      _
    $region43: #{tpu_custom_call.1} parent=1 // pred_check_branch
      %1394 = sbr.rel (0) target = $region45
    $region44: #{tpu_custom_call.1} parent=1 // pred_region
      %1396 = vsyncadd [#allocation12], 0
      %s1398 = sshll.u32 [#allocation11], 4
      %s1399 = int_to_ptr.vmem [resolvable:$true] %s1398
      %s1400 = sshll.u32 %s6, 4
      %s1401 = int_to_ptr.hbm [resolvable:$true] %s1400
      %1403 = dma.vmem_to_hbm [thread:$0]  %s1399, 32, %s1401, [#allocation12]
    $region45: #{tpu_custom_call.1} parent=1 // pred_fallthru
      _
    // Predicated region
    $region46: #{tpu_custom_call.1} parent=1 // pred_check
      _
    $region47: #{tpu_custom_call.1} parent=1 // pred_check_branch
      %1405 = sbr.rel (0) target = $region49
    $region48: #{tpu_custom_call.1} parent=1 // pred_region
      %1407 = dma.done [#allocation4], 128
    $region49: #{tpu_custom_call.1} parent=1 // pred_fallthru
      _
    // Predicated region
    $region50: #{tpu_custom_call.1} parent=1 // pred_check
      _
    $region51: #{tpu_custom_call.1} parent=1 // pred_check_branch
      %1409 = sbr.rel (0) target = $region53
    $region52: #{tpu_custom_call.1} parent=1 // pred_region
      %1411 = dma.done [#allocation12], 32
    $region53: #{tpu_custom_call.1} parent=1 // pred_fallthru
      _
    %1412 = vsyncpa [#allocation3], 1
    %1413 = vsyncpa [#allocation6], 1
    %1414 = vsyncpa [#allocation9], 1
    %1415 = vsyncpa [#allocation4], 1
    %1416 = vsyncpa [#allocation12], 1

</llo_original>
